<compile_context>
chip_gen: v5e
topology: v5e:2x2
jax: 0.10.0
libtpu: 0.0.40
codegen_flags: <defaults>
</compile_context>

<pallas_src>
import math
import jax
import jax.numpy as jnp
from jax.experimental import pallas as pl
from jax.experimental.pallas import tpu as pltpu

# ----------------------------- config ---------------------------------------
B, S, D = 2, 8, 32          # batch, seq, d_model
N_HEAD = 4
D_HEAD = D // N_HEAD
DFF = 64                    # dim_feedforward
EPS = 1e-6
BS = B * S


def _layer_norm(x, a2, b2):
    # x: (rows, D); a2, b2: (1, D); matches torch: unbiased std, eps on std
    mean = jnp.mean(x, axis=-1, keepdims=True)
    var = jnp.sum((x - mean) ** 2, axis=-1, keepdims=True) / (x.shape[-1] - 1)
    std = jnp.sqrt(var)
    return a2 * (x - mean) / (std + EPS) + b2


def encoder_layer_kernel(x_ref, wqkv_ref, bqkv_ref, wo_ref, w1_ref, b1_ref,
                         w2_ref, vecs_ref, mask_ref, out_ref):
    xf = x_ref[...]                       # (B*S, D) flattened tokens
    vecs = vecs_ref[...]                  # (6, D): bo, ln1a, ln1b, b2, ln2a, ln2b
    bo, ln1a, ln1b = vecs[0:1], vecs[1:2], vecs[2:3]
    b2, ln2a, ln2b = vecs[3:4], vecs[4:5], vecs[5:6]
    neg = mask_ref[...]                   # (B*S, B*S) additive block-diag mask

    # ---- fused Q/K/V projection: (B*S, D) @ (D, 3D) -------------------------
    qkv = jnp.dot(xf, wqkv_ref[...],
                  preferred_element_type=jnp.float32) + bqkv_ref[...]
    q, k, v = qkv[:, 0:D], qkv[:, D:2 * D], qkv[:, 2 * D:3 * D]

    scale = 1.0 / math.sqrt(D_HEAD)
    woT = wo_ref[...]                     # (D, D), already transposed on host

    # ---- multi-head self attention over all tokens (static head unroll) -----
    # Cross-batch key/query pairs are masked to -1e9; after the row-max
    # subtraction they underflow to exactly 0 in exp(), so this is bit-for-bit
    # the same as per-batch softmax, with no per-batch loop / concat.
    proj = jnp.zeros((BS, D), jnp.float32)
    for h in range(N_HEAD):
        lo, hi = h * D_HEAD, (h + 1) * D_HEAD
        qh, kh, vh = q[:, lo:hi], k[:, lo:hi], v[:, lo:hi]
        s = jnp.dot(qh, kh.T, preferred_element_type=jnp.float32) * scale + neg
        s = s - jnp.max(s, axis=-1, keepdims=True)
        p = jnp.exp(s)
        p = p / jnp.sum(p, axis=-1, keepdims=True)            # softmax over keys
        ho = jnp.dot(p, vh, preferred_element_type=jnp.float32)       # (BS, d)
        # fold the head output through its slab of the output projection
        proj = proj + jnp.dot(ho, woT[lo:hi, :],
                              preferred_element_type=jnp.float32)
    attn = proj + bo + xf                 # output bias + residual
    x1 = _layer_norm(attn, ln1a, ln1b)

    # ---- position-wise feed forward (dropout -> identity) -------------------
    h1 = jnp.dot(x1, w1_ref[...], preferred_element_type=jnp.float32) + b1_ref[...]
    h1 = jnp.maximum(h1, 0.0)
    h2 = jnp.dot(h1, w2_ref[...], preferred_element_type=jnp.float32) + b2 + x1
    out_ref[...] = _layer_norm(h2, ln2a, ln2b)


@jax.jit
def encoder_layer(x, params):
    (wq, bq, wk, bk, wv, bv, wo, bo, ln1a, ln1b,
     w1, b1, w2, b2, ln2a, ln2b) = params
    Bv, Sv, Dv = x.shape

    # host-side packing / pre-transposition (free layout plumbing)
    wqkvT = jnp.concatenate([wq.T, wk.T, wv.T], axis=1)               # (D, 3D)
    bqkv = jnp.concatenate([bq, bk, bv], axis=1)                      # (1, 3D)
    vecs = jnp.concatenate([bo, ln1a, ln1b, b2, ln2a, ln2b], axis=0)  # (6, D)
    xf = x.reshape(Bv * Sv, Dv)                                       # flatten batch

    # block-diagonal additive mask so flattened batches never attend to each
    # other (constant, folded by XLA).  mask=None user path otherwise.
    tok_batch = jnp.arange(Bv * Sv, dtype=jnp.int32) // Sv
    neg_mask = jnp.where(tok_batch[:, None] == tok_batch[None, :],
                         0.0, -1e9).astype(jnp.float32)               # (BS, BS)

    vmem = pl.BlockSpec(memory_space=pltpu.MemorySpace.VMEM)
    out = pl.pallas_call(
        encoder_layer_kernel,
        out_shape=jax.ShapeDtypeStruct((Bv * Sv, Dv), jnp.float32),
        in_specs=[vmem] * 9,
        out_specs=vmem,
    )(xf, wqkvT, bqkv, wo.T, w1.T, b1, w2.T, vecs, neg_mask)
    return out.reshape(Bv, Sv, Dv)


# ------------------------- pure-JAX reference --------------------------------
def encoder_layer_ref(x, params):
    (wq, bq, wk, bk, wv, bv, wo, bo, ln1a, ln1b,
     w1, b1, w2, b2, ln2a, ln2b) = params

    def ln(t, a, g):
        mean = jnp.mean(t, axis=-1, keepdims=True)
        var = jnp.sum((t - mean) ** 2, axis=-1, keepdims=True) / (t.shape[-1] - 1)
        return a * (t - mean) / (jnp.sqrt(var) + EPS) + g

    res = x
    q = x @ wq.T + bq
    k = x @ wk.T + bk
    v = x @ wv.T + bv
    qh = q.reshape(B, S, N_HEAD, D_HEAD).transpose(0, 2, 1, 3)
    kh = k.reshape(B, S, N_HEAD, D_HEAD).transpose(0, 2, 1, 3)
    vh = v.reshape(B, S, N_HEAD, D_HEAD).transpose(0, 2, 1, 3)
    sc = jnp.einsum('bhqd,bhkd->bhqk', qh, kh) / math.sqrt(D_HEAD)
    p = jax.nn.softmax(sc, axis=-1)
    o = jnp.einsum('bhqk,bhkd->bhqd', p, vh).transpose(0, 2, 1, 3).reshape(B, S, D)
    o = o @ wo.T + bo + res
    x1 = ln(o, ln1a, ln1b)
    h = jax.nn.relu(x1 @ w1.T + b1) @ w2.T + b2 + x1
    return ln(h, ln2a, ln2b)


if __name__ == "__main__":
    key = jax.random.PRNGKey(0)
    ks = jax.random.split(key, 16)

    def rnd(k, shape, scale=0.1):
        return jax.random.normal(k, shape, dtype=jnp.float32) * scale

    params = (
        rnd(ks[0], (D, D)), rnd(ks[1], (1, D)),        # wq, bq
        rnd(ks[2], (D, D)), rnd(ks[3], (1, D)),        # wk, bk
        rnd(ks[4], (D, D)), rnd(ks[5], (1, D)),        # wv, bv
        rnd(ks[6], (D, D)), rnd(ks[7], (1, D)),        # wo, bo
        jnp.ones((1, D), jnp.float32), jnp.zeros((1, D), jnp.float32),   # ln1
        rnd(ks[8], (DFF, D)), rnd(ks[9], (1, DFF)),    # w1, b1
        rnd(ks[10], (D, DFF)), rnd(ks[11], (1, D)),    # w2, b2
        jnp.ones((1, D), jnp.float32), jnp.zeros((1, D), jnp.float32),   # ln2
    )

    x = jax.random.normal(ks[12], (B, S, D), dtype=jnp.float32)

    out = encoder_layer(x, params)
    out = jax.block_until_ready(out)

    ref = encoder_layer_ref(x, params)
    assert out.shape == (B, S, D)
    assert jnp.allclose(out, ref, rtol=1e-3, atol=1e-3), "mismatch vs reference"

    print("KERNEL_OK")
</pallas_src>

<mosaic_0001>
module attributes {stable_mosaic.version = 11 : i64} {
  func.func @encoder_layer_kernel(%arg0: memref<16x32xf32, #tpu.memory_space<vmem>>, %arg1: memref<32x96xf32, #tpu.memory_space<vmem>>, %arg2: memref<1x96xf32, #tpu.memory_space<vmem>>, %arg3: memref<32x32xf32, #tpu.memory_space<vmem>>, %arg4: memref<32x64xf32, #tpu.memory_space<vmem>>, %arg5: memref<1x64xf32, #tpu.memory_space<vmem>>, %arg6: memref<64x32xf32, #tpu.memory_space<vmem>>, %arg7: memref<6x32xf32, #tpu.memory_space<vmem>>, %arg8: memref<16x16xf32, #tpu.memory_space<vmem>>, %arg9: memref<16x32xf32, #tpu.memory_space<vmem>>) attributes {dimension_semantics = [], scalar_prefetch = 0 : i64, scratch_operands = 0 : i64, tpu.core_type = #tpu.core_type<tc>} {
    %c0 = arith.constant 0 : index
    %c0_0 = arith.constant 0 : index
    %0 = vector.load %arg0[%c0, %c0_0] : memref<16x32xf32, #tpu.memory_space<vmem>>, vector<16x32xf32>
    %c0_1 = arith.constant 0 : index
    %c0_2 = arith.constant 0 : index
    %1 = vector.load %arg7[%c0_1, %c0_2] : memref<6x32xf32, #tpu.memory_space<vmem>>, vector<6x32xf32>
    %2 = vector.extract_strided_slice %1 {offsets = [0, 0], sizes = [1, 32], strides = [1, 1]} : vector<6x32xf32> to vector<1x32xf32>
    %3 = vector.extract_strided_slice %1 {offsets = [1, 0], sizes = [1, 32], strides = [1, 1]} : vector<6x32xf32> to vector<1x32xf32>
    %4 = vector.extract_strided_slice %1 {offsets = [2, 0], sizes = [1, 32], strides = [1, 1]} : vector<6x32xf32> to vector<1x32xf32>
    %5 = vector.extract_strided_slice %1 {offsets = [3, 0], sizes = [1, 32], strides = [1, 1]} : vector<6x32xf32> to vector<1x32xf32>
    %6 = vector.extract_strided_slice %1 {offsets = [4, 0], sizes = [1, 32], strides = [1, 1]} : vector<6x32xf32> to vector<1x32xf32>
    %7 = vector.extract_strided_slice %1 {offsets = [5, 0], sizes = [1, 32], strides = [1, 1]} : vector<6x32xf32> to vector<1x32xf32>
    %c0_3 = arith.constant 0 : index
    %c0_4 = arith.constant 0 : index
    %8 = vector.load %arg8[%c0_3, %c0_4] : memref<16x16xf32, #tpu.memory_space<vmem>>, vector<16x16xf32>
    %c0_5 = arith.constant 0 : index
    %c0_6 = arith.constant 0 : index
    %9 = vector.load %arg1[%c0_5, %c0_6] : memref<32x96xf32, #tpu.memory_space<vmem>>, vector<32x96xf32>
    %cst = arith.constant dense<0.000000e+00> : vector<16x96xf32>
    %10 = tpu.matmul %0, %9, %cst {dimension_numbers = #tpu.dot_dimension_numbers<[1], [0], [0], [1], [0, 0, 1, 1], [], []>} : vector<16x32xf32>, vector<32x96xf32>, vector<16x96xf32> -> vector<16x96xf32>
    %c0_7 = arith.constant 0 : index
    %c0_8 = arith.constant 0 : index
    %11 = vector.load %arg2[%c0_7, %c0_8] : memref<1x96xf32, #tpu.memory_space<vmem>>, vector<1x96xf32>
    %12 = vector.broadcast %11 : vector<1x96xf32> to vector<16x96xf32>
    %13 = arith.addf %10, %12 : vector<16x96xf32>
    %14 = vector.extract_strided_slice %13 {offsets = [0, 0], sizes = [16, 32], strides = [1, 1]} : vector<16x96xf32> to vector<16x32xf32>
    %15 = vector.extract_strided_slice %13 {offsets = [0, 32], sizes = [16, 32], strides = [1, 1]} : vector<16x96xf32> to vector<16x32xf32>
    %16 = vector.extract_strided_slice %13 {offsets = [0, 64], sizes = [16, 32], strides = [1, 1]} : vector<16x96xf32> to vector<16x32xf32>
    %c0_9 = arith.constant 0 : index
    %c0_10 = arith.constant 0 : index
    %17 = vector.load %arg3[%c0_9, %c0_10] : memref<32x32xf32, #tpu.memory_space<vmem>>, vector<32x32xf32>
    %cst_11 = arith.constant 0.000000e+00 : f32
    %18 = vector.broadcast %cst_11 : f32 to vector<16x32xf32>
    %19 = vector.extract_strided_slice %14 {offsets = [0, 0], sizes = [16, 8], strides = [1, 1]} : vector<16x32xf32> to vector<16x8xf32>
    %20 = vector.extract_strided_slice %15 {offsets = [0, 0], sizes = [16, 8], strides = [1, 1]} : vector<16x32xf32> to vector<16x8xf32>
    %21 = vector.extract_strided_slice %16 {offsets = [0, 0], sizes = [16, 8], strides = [1, 1]} : vector<16x32xf32> to vector<16x8xf32>
    %22 = tpu.transpose %20, [1, 0] : vector<16x8xf32> -> vector<8x16xf32>
    %cst_12 = arith.constant dense<0.000000e+00> : vector<16x16xf32>
    %23 = tpu.matmul %19, %22, %cst_12 {dimension_numbers = #tpu.dot_dimension_numbers<[1], [0], [0], [1], [0, 0, 1, 1], [], []>} : vector<16x8xf32>, vector<8x16xf32>, vector<16x16xf32> -> vector<16x16xf32>
    %cst_13 = arith.constant 0.353553385 : f32
    %24 = vector.broadcast %cst_13 : f32 to vector<16x16xf32>
    %25 = arith.mulf %23, %24 : vector<16x16xf32>
    %26 = arith.addf %25, %8 : vector<16x16xf32>
    %cst_14 = arith.constant dense<0xFF800000> : vector<16xf32>
    %27 = vector.multi_reduction <maximumf>, %26, %cst_14 [1] : vector<16x16xf32> to vector<16xf32>
    %28 = vector.shape_cast %27 : vector<16xf32> to vector<16x1xf32>
    %29 = vector.broadcast %28 : vector<16x1xf32> to vector<16x16xf32>
    %30 = arith.subf %26, %29 : vector<16x16xf32>
    %31 = math.exp %30 : vector<16x16xf32>
    %cst_15 = arith.constant dense<0.000000e+00> : vector<16xf32>
    %32 = vector.multi_reduction <add>, %31, %cst_15 [1] : vector<16x16xf32> to vector<16xf32>
    %33 = vector.shape_cast %32 : vector<16xf32> to vector<16x1xf32>
    %34 = vector.broadcast %33 : vector<16x1xf32> to vector<16x16xf32>
    %35 = arith.divf %31, %34 : vector<16x16xf32>
    %cst_16 = arith.constant dense<0.000000e+00> : vector<16x8xf32>
    %36 = tpu.matmul %35, %21, %cst_16 {dimension_numbers = #tpu.dot_dimension_numbers<[1], [0], [0], [1], [0, 0, 1, 1], [], []>} : vector<16x16xf32>, vector<16x8xf32>, vector<16x8xf32> -> vector<16x8xf32>
    %37 = vector.extract_strided_slice %17 {offsets = [0, 0], sizes = [8, 32], strides = [1, 1]} : vector<32x32xf32> to vector<8x32xf32>
    %cst_17 = arith.constant dense<0.000000e+00> : vector<16x32xf32>
    %38 = tpu.matmul %36, %37, %cst_17 {dimension_numbers = #tpu.dot_dimension_numbers<[1], [0], [0], [1], [0, 0, 1, 1], [], []>} : vector<16x8xf32>, vector<8x32xf32>, vector<16x32xf32> -> vector<16x32xf32>
    %39 = arith.addf %18, %38 : vector<16x32xf32>
    %40 = vector.extract_strided_slice %14 {offsets = [0, 8], sizes = [16, 8], strides = [1, 1]} : vector<16x32xf32> to vector<16x8xf32>
    %41 = vector.extract_strided_slice %15 {offsets = [0, 8], sizes = [16, 8], strides = [1, 1]} : vector<16x32xf32> to vector<16x8xf32>
    %42 = vector.extract_strided_slice %16 {offsets = [0, 8], sizes = [16, 8], strides = [1, 1]} : vector<16x32xf32> to vector<16x8xf32>
    %43 = tpu.transpose %41, [1, 0] : vector<16x8xf32> -> vector<8x16xf32>
    %cst_18 = arith.constant dense<0.000000e+00> : vector<16x16xf32>
    %44 = tpu.matmul %40, %43, %cst_18 {dimension_numbers = #tpu.dot_dimension_numbers<[1], [0], [0], [1], [0, 0, 1, 1], [], []>} : vector<16x8xf32>, vector<8x16xf32>, vector<16x16xf32> -> vector<16x16xf32>
    %cst_19 = arith.constant 0.353553385 : f32
    %45 = vector.broadcast %cst_19 : f32 to vector<16x16xf32>
    %46 = arith.mulf %44, %45 : vector<16x16xf32>
    %47 = arith.addf %46, %8 : vector<16x16xf32>
    %cst_20 = arith.constant dense<0xFF800000> : vector<16xf32>
    %48 = vector.multi_reduction <maximumf>, %47, %cst_20 [1] : vector<16x16xf32> to vector<16xf32>
    %49 = vector.shape_cast %48 : vector<16xf32> to vector<16x1xf32>
    %50 = vector.broadcast %49 : vector<16x1xf32> to vector<16x16xf32>
    %51 = arith.subf %47, %50 : vector<16x16xf32>
    %52 = math.exp %51 : vector<16x16xf32>
    %cst_21 = arith.constant dense<0.000000e+00> : vector<16xf32>
    %53 = vector.multi_reduction <add>, %52, %cst_21 [1] : vector<16x16xf32> to vector<16xf32>
    %54 = vector.shape_cast %53 : vector<16xf32> to vector<16x1xf32>
    %55 = vector.broadcast %54 : vector<16x1xf32> to vector<16x16xf32>
    %56 = arith.divf %52, %55 : vector<16x16xf32>
    %cst_22 = arith.constant dense<0.000000e+00> : vector<16x8xf32>
    %57 = tpu.matmul %56, %42, %cst_22 {dimension_numbers = #tpu.dot_dimension_numbers<[1], [0], [0], [1], [0, 0, 1, 1], [], []>} : vector<16x16xf32>, vector<16x8xf32>, vector<16x8xf32> -> vector<16x8xf32>
    %58 = vector.extract_strided_slice %17 {offsets = [8, 0], sizes = [8, 32], strides = [1, 1]} : vector<32x32xf32> to vector<8x32xf32>
    %cst_23 = arith.constant dense<0.000000e+00> : vector<16x32xf32>
    %59 = tpu.matmul %57, %58, %cst_23 {dimension_numbers = #tpu.dot_dimension_numbers<[1], [0], [0], [1], [0, 0, 1, 1], [], []>} : vector<16x8xf32>, vector<8x32xf32>, vector<16x32xf32> -> vector<16x32xf32>
    %60 = arith.addf %39, %59 : vector<16x32xf32>
    %61 = vector.extract_strided_slice %14 {offsets = [0, 16], sizes = [16, 8], strides = [1, 1]} : vector<16x32xf32> to vector<16x8xf32>
    %62 = vector.extract_strided_slice %15 {offsets = [0, 16], sizes = [16, 8], strides = [1, 1]} : vector<16x32xf32> to vector<16x8xf32>
    %63 = vector.extract_strided_slice %16 {offsets = [0, 16], sizes = [16, 8], strides = [1, 1]} : vector<16x32xf32> to vector<16x8xf32>
    %64 = tpu.transpose %62, [1, 0] : vector<16x8xf32> -> vector<8x16xf32>
    %cst_24 = arith.constant dense<0.000000e+00> : vector<16x16xf32>
    %65 = tpu.matmul %61, %64, %cst_24 {dimension_numbers = #tpu.dot_dimension_numbers<[1], [0], [0], [1], [0, 0, 1, 1], [], []>} : vector<16x8xf32>, vector<8x16xf32>, vector<16x16xf32> -> vector<16x16xf32>
    %cst_25 = arith.constant 0.353553385 : f32
    %66 = vector.broadcast %cst_25 : f32 to vector<16x16xf32>
    %67 = arith.mulf %65, %66 : vector<16x16xf32>
    %68 = arith.addf %67, %8 : vector<16x16xf32>
    %cst_26 = arith.constant dense<0xFF800000> : vector<16xf32>
    %69 = vector.multi_reduction <maximumf>, %68, %cst_26 [1] : vector<16x16xf32> to vector<16xf32>
    %70 = vector.shape_cast %69 : vector<16xf32> to vector<16x1xf32>
    %71 = vector.broadcast %70 : vector<16x1xf32> to vector<16x16xf32>
    %72 = arith.subf %68, %71 : vector<16x16xf32>
    %73 = math.exp %72 : vector<16x16xf32>
    %cst_27 = arith.constant dense<0.000000e+00> : vector<16xf32>
    %74 = vector.multi_reduction <add>, %73, %cst_27 [1] : vector<16x16xf32> to vector<16xf32>
    %75 = vector.shape_cast %74 : vector<16xf32> to vector<16x1xf32>
    %76 = vector.broadcast %75 : vector<16x1xf32> to vector<16x16xf32>
    %77 = arith.divf %73, %76 : vector<16x16xf32>
    %cst_28 = arith.constant dense<0.000000e+00> : vector<16x8xf32>
    %78 = tpu.matmul %77, %63, %cst_28 {dimension_numbers = #tpu.dot_dimension_numbers<[1], [0], [0], [1], [0, 0, 1, 1], [], []>} : vector<16x16xf32>, vector<16x8xf32>, vector<16x8xf32> -> vector<16x8xf32>
    %79 = vector.extract_strided_slice %17 {offsets = [16, 0], sizes = [8, 32], strides = [1, 1]} : vector<32x32xf32> to vector<8x32xf32>
    %cst_29 = arith.constant dense<0.000000e+00> : vector<16x32xf32>
    %80 = tpu.matmul %78, %79, %cst_29 {dimension_numbers = #tpu.dot_dimension_numbers<[1], [0], [0], [1], [0, 0, 1, 1], [], []>} : vector<16x8xf32>, vector<8x32xf32>, vector<16x32xf32> -> vector<16x32xf32>
    %81 = arith.addf %60, %80 : vector<16x32xf32>
    %82 = vector.extract_strided_slice %14 {offsets = [0, 24], sizes = [16, 8], strides = [1, 1]} : vector<16x32xf32> to vector<16x8xf32>
    %83 = vector.extract_strided_slice %15 {offsets = [0, 24], sizes = [16, 8], strides = [1, 1]} : vector<16x32xf32> to vector<16x8xf32>
    %84 = vector.extract_strided_slice %16 {offsets = [0, 24], sizes = [16, 8], strides = [1, 1]} : vector<16x32xf32> to vector<16x8xf32>
    %85 = tpu.transpose %83, [1, 0] : vector<16x8xf32> -> vector<8x16xf32>
    %cst_30 = arith.constant dense<0.000000e+00> : vector<16x16xf32>
    %86 = tpu.matmul %82, %85, %cst_30 {dimension_numbers = #tpu.dot_dimension_numbers<[1], [0], [0], [1], [0, 0, 1, 1], [], []>} : vector<16x8xf32>, vector<8x16xf32>, vector<16x16xf32> -> vector<16x16xf32>
    %cst_31 = arith.constant 0.353553385 : f32
    %87 = vector.broadcast %cst_31 : f32 to vector<16x16xf32>
    %88 = arith.mulf %86, %87 : vector<16x16xf32>
    %89 = arith.addf %88, %8 : vector<16x16xf32>
    %cst_32 = arith.constant dense<0xFF800000> : vector<16xf32>
    %90 = vector.multi_reduction <maximumf>, %89, %cst_32 [1] : vector<16x16xf32> to vector<16xf32>
    %91 = vector.shape_cast %90 : vector<16xf32> to vector<16x1xf32>
    %92 = vector.broadcast %91 : vector<16x1xf32> to vector<16x16xf32>
    %93 = arith.subf %89, %92 : vector<16x16xf32>
    %94 = math.exp %93 : vector<16x16xf32>
    %cst_33 = arith.constant dense<0.000000e+00> : vector<16xf32>
    %95 = vector.multi_reduction <add>, %94, %cst_33 [1] : vector<16x16xf32> to vector<16xf32>
    %96 = vector.shape_cast %95 : vector<16xf32> to vector<16x1xf32>
    %97 = vector.broadcast %96 : vector<16x1xf32> to vector<16x16xf32>
    %98 = arith.divf %94, %97 : vector<16x16xf32>
    %cst_34 = arith.constant dense<0.000000e+00> : vector<16x8xf32>
    %99 = tpu.matmul %98, %84, %cst_34 {dimension_numbers = #tpu.dot_dimension_numbers<[1], [0], [0], [1], [0, 0, 1, 1], [], []>} : vector<16x16xf32>, vector<16x8xf32>, vector<16x8xf32> -> vector<16x8xf32>
    %100 = vector.extract_strided_slice %17 {offsets = [24, 0], sizes = [8, 32], strides = [1, 1]} : vector<32x32xf32> to vector<8x32xf32>
    %cst_35 = arith.constant dense<0.000000e+00> : vector<16x32xf32>
    %101 = tpu.matmul %99, %100, %cst_35 {dimension_numbers = #tpu.dot_dimension_numbers<[1], [0], [0], [1], [0, 0, 1, 1], [], []>} : vector<16x8xf32>, vector<8x32xf32>, vector<16x32xf32> -> vector<16x32xf32>
    %102 = arith.addf %81, %101 : vector<16x32xf32>
    %103 = vector.broadcast %2 : vector<1x32xf32> to vector<16x32xf32>
    %104 = arith.addf %102, %103 : vector<16x32xf32>
    %105 = arith.addf %104, %0 : vector<16x32xf32>
    %cst_36 = arith.constant dense<0.000000e+00> : vector<16xf32>
    %106 = vector.multi_reduction <add>, %105, %cst_36 [1] : vector<16x32xf32> to vector<16xf32>
    %107 = vector.shape_cast %106 : vector<16xf32> to vector<16x1xf32>
    %cst_37 = arith.constant 3.200000e+01 : f32
    %108 = vector.broadcast %cst_37 : f32 to vector<16x1xf32>
    %109 = arith.divf %107, %108 : vector<16x1xf32>
    %110 = vector.broadcast %109 : vector<16x1xf32> to vector<16x32xf32>
    %111 = arith.subf %105, %110 : vector<16x32xf32>
    %112 = arith.mulf %111, %111 : vector<16x32xf32>
    %cst_38 = arith.constant dense<0.000000e+00> : vector<16xf32>
    %113 = vector.multi_reduction <add>, %112, %cst_38 [1] : vector<16x32xf32> to vector<16xf32>
    %114 = vector.shape_cast %113 : vector<16xf32> to vector<16x1xf32>
    %cst_39 = arith.constant 3.100000e+01 : f32
    %115 = vector.broadcast %cst_39 : f32 to vector<16x1xf32>
    %116 = arith.divf %114, %115 : vector<16x1xf32>
    %117 = math.sqrt %116 : vector<16x1xf32>
    %118 = vector.broadcast %109 : vector<16x1xf32> to vector<16x32xf32>
    %119 = arith.subf %105, %118 : vector<16x32xf32>
    %120 = vector.broadcast %3 : vector<1x32xf32> to vector<16x32xf32>
    %121 = arith.mulf %120, %119 : vector<16x32xf32>
    %cst_40 = arith.constant 9.99999997E-7 : f32
    %122 = vector.broadcast %cst_40 : f32 to vector<16x1xf32>
    %123 = arith.addf %117, %122 : vector<16x1xf32>
    %124 = vector.broadcast %123 : vector<16x1xf32> to vector<16x32xf32>
    %125 = arith.divf %121, %124 : vector<16x32xf32>
    %126 = vector.broadcast %4 : vector<1x32xf32> to vector<16x32xf32>
    %127 = arith.addf %125, %126 : vector<16x32xf32>
    %c0_41 = arith.constant 0 : index
    %c0_42 = arith.constant 0 : index
    %128 = vector.load %arg4[%c0_41, %c0_42] : memref<32x64xf32, #tpu.memory_space<vmem>>, vector<32x64xf32>
    %cst_43 = arith.constant dense<0.000000e+00> : vector<16x64xf32>
    %129 = tpu.matmul %127, %128, %cst_43 {dimension_numbers = #tpu.dot_dimension_numbers<[1], [0], [0], [1], [0, 0, 1, 1], [], []>} : vector<16x32xf32>, vector<32x64xf32>, vector<16x64xf32> -> vector<16x64xf32>
    %c0_44 = arith.constant 0 : index
    %c0_45 = arith.constant 0 : index
    %130 = vector.load %arg5[%c0_44, %c0_45] : memref<1x64xf32, #tpu.memory_space<vmem>>, vector<1x64xf32>
    %131 = vector.broadcast %130 : vector<1x64xf32> to vector<16x64xf32>
    %132 = arith.addf %129, %131 : vector<16x64xf32>
    %cst_46 = arith.constant 0.000000e+00 : f32
    %133 = vector.broadcast %cst_46 : f32 to vector<16x64xf32>
    %134 = arith.maximumf %132, %133 : vector<16x64xf32>
    %c0_47 = arith.constant 0 : index
    %c0_48 = arith.constant 0 : index
    %135 = vector.load %arg6[%c0_47, %c0_48] : memref<64x32xf32, #tpu.memory_space<vmem>>, vector<64x32xf32>
    %cst_49 = arith.constant dense<0.000000e+00> : vector<16x32xf32>
    %136 = tpu.matmul %134, %135, %cst_49 {dimension_numbers = #tpu.dot_dimension_numbers<[1], [0], [0], [1], [0, 0, 1, 1], [], []>} : vector<16x64xf32>, vector<64x32xf32>, vector<16x32xf32> -> vector<16x32xf32>
    %137 = vector.broadcast %5 : vector<1x32xf32> to vector<16x32xf32>
    %138 = arith.addf %136, %137 : vector<16x32xf32>
    %139 = arith.addf %138, %127 : vector<16x32xf32>
    %cst_50 = arith.constant dense<0.000000e+00> : vector<16xf32>
    %140 = vector.multi_reduction <add>, %139, %cst_50 [1] : vector<16x32xf32> to vector<16xf32>
    %141 = vector.shape_cast %140 : vector<16xf32> to vector<16x1xf32>
    %cst_51 = arith.constant 3.200000e+01 : f32
    %142 = vector.broadcast %cst_51 : f32 to vector<16x1xf32>
    %143 = arith.divf %141, %142 : vector<16x1xf32>
    %144 = vector.broadcast %143 : vector<16x1xf32> to vector<16x32xf32>
    %145 = arith.subf %139, %144 : vector<16x32xf32>
    %146 = arith.mulf %145, %145 : vector<16x32xf32>
    %cst_52 = arith.constant dense<0.000000e+00> : vector<16xf32>
    %147 = vector.multi_reduction <add>, %146, %cst_52 [1] : vector<16x32xf32> to vector<16xf32>
    %148 = vector.shape_cast %147 : vector<16xf32> to vector<16x1xf32>
    %cst_53 = arith.constant 3.100000e+01 : f32
    %149 = vector.broadcast %cst_53 : f32 to vector<16x1xf32>
    %150 = arith.divf %148, %149 : vector<16x1xf32>
    %151 = math.sqrt %150 : vector<16x1xf32>
    %152 = vector.broadcast %143 : vector<16x1xf32> to vector<16x32xf32>
    %153 = arith.subf %139, %152 : vector<16x32xf32>
    %154 = vector.broadcast %6 : vector<1x32xf32> to vector<16x32xf32>
    %155 = arith.mulf %154, %153 : vector<16x32xf32>
    %cst_54 = arith.constant 9.99999997E-7 : f32
    %156 = vector.broadcast %cst_54 : f32 to vector<16x1xf32>
    %157 = arith.addf %151, %156 : vector<16x1xf32>
    %158 = vector.broadcast %157 : vector<16x1xf32> to vector<16x32xf32>
    %159 = arith.divf %155, %158 : vector<16x32xf32>
    %160 = vector.broadcast %7 : vector<1x32xf32> to vector<16x32xf32>
    %161 = arith.addf %159, %160 : vector<16x32xf32>
    %c0_55 = arith.constant 0 : index
    %c0_56 = arith.constant 0 : index
    %162 = vector.load %arg9[%c0_55, %c0_56] : memref<16x32xf32, #tpu.memory_space<vmem>>, vector<16x32xf32>
    tpu.vector_store %arg9[%c0_55, %c0_56], %161 {strides = array<i32>} : memref<16x32xf32, #tpu.memory_space<vmem>>, vector<16x32xf32>,
    return
  }
}

</mosaic_0001>

<llo_original>
// kernel: encoder_layer.1
$region0: #{encoder_layer.1}
  #allocation0 [shape = 'u32[]', space=smem, size = 0x4, offset = 0x4, fixed_abs, tag = 'smem constant byte address 0x4 - core index']
  #allocation1 [shape = 'u32[72,128]{1,0:T(1,128)}', space=vmem, size = 0x9000, scoped, tag = 'internal scratch']
  %s0 = inlined_call_operand.vmem [shape: f32[16,32], index: 0, kind: input, shape index: {}]
  %s1 = inlined_call_operand.vmem [shape: f32[32,96], index: 1, kind: input, shape index: {}]
  %s2 = inlined_call_operand.vmem [shape: f32[1,96], index: 2, kind: input, shape index: {}]
  %s3 = inlined_call_operand.vmem [shape: f32[32,32], index: 3, kind: input, shape index: {}]
  %s4 = inlined_call_operand.vmem [shape: f32[32,64], index: 4, kind: input, shape index: {}]
  %s5 = inlined_call_operand.vmem [shape: f32[1,64], index: 5, kind: input, shape index: {}]
  %s6 = inlined_call_operand.vmem [shape: f32[64,32], index: 6, kind: input, shape index: {}]
  %s7 = inlined_call_operand.vmem [shape: f32[6,32], index: 7, kind: input, shape index: {}]
  %s8 = inlined_call_operand.vmem [shape: f32[16,16], index: 8, kind: input, shape index: {}]
  %s9 = inlined_call_operand.hbm [shape: f32[16,32], index: 9, kind: output, shape index: {}]
  %s10 = sld [smem:[#allocation0]]
  $region46: #{encoder_layer.1} parent=0
    _
  %s12 = ssub.s32 1, %s10
  %s13 = scalar_select 0, %s12, %s10
  $region1: #{encoder_layer.1} parent=0
    #allocation2 [shape = 'u8[8192]{0}', space=vmem, size = 0x2000, scoped, tag = 'output window, operand 0, single buffered']
    #allocation3 [shape = 's32[1]{0}', space=sflag, size = 0x4, scoped, tag = 'scoped memory for encoder_layer.1']
    %14 = vsyncpa [#allocation3], 0
    // Predicated region
    $region2: #{encoder_layer.1} parent=1 // pred_check
      _
    $region3: #{encoder_layer.1} parent=1 // pred_check_branch
      %16 = sbr.rel (0) target = $region5
    $region4: #{encoder_layer.1} parent=1 // pred_region
      _
    $region5: #{encoder_layer.1} parent=1 // pred_fallthru
      _
    // Predicated region
    $region6: #{encoder_layer.1} parent=1 // pred_check
      _
    $region7: #{encoder_layer.1} parent=1 // pred_check_branch
      %18 = sbr.rel (0) target = $region9
    $region8: #{encoder_layer.1} parent=1 // pred_region
      _
    $region9: #{encoder_layer.1} parent=1 // pred_fallthru
      _
    // Predicated region
    $region10: #{encoder_layer.1} parent=1 // pred_check
      _
    $region11: #{encoder_layer.1} parent=1 // pred_check_branch
      %20 = sbr.rel (0) target = $region13
    $region12: #{encoder_layer.1} parent=1 // pred_region
      _
    $region13: #{encoder_layer.1} parent=1 // pred_fallthru
      _
    // Predicated region
    $region14: #{encoder_layer.1} parent=1 // pred_check
      _
    $region15: #{encoder_layer.1} parent=1 // pred_check_branch
      %22 = sbr.rel (0) target = $region17
    $region16: #{encoder_layer.1} parent=1 // pred_region
      _
    $region17: #{encoder_layer.1} parent=1 // pred_fallthru
      _
    // Predicated region
    $region18: #{encoder_layer.1} parent=1 // pred_check
      _
    $region19: #{encoder_layer.1} parent=1 // pred_check_branch
      %24 = sbr.rel (0) target = $region21
    $region20: #{encoder_layer.1} parent=1 // pred_region
      _
    $region21: #{encoder_layer.1} parent=1 // pred_fallthru
      _
    // Predicated region
    $region22: #{encoder_layer.1} parent=1 // pred_check
      _
    $region23: #{encoder_layer.1} parent=1 // pred_check_branch
      %26 = sbr.rel (0) target = $region25
    $region24: #{encoder_layer.1} parent=1 // pred_region
      _
    $region25: #{encoder_layer.1} parent=1 // pred_fallthru
      _
    // Predicated region
    $region26: #{encoder_layer.1} parent=1 // pred_check
      _
    $region27: #{encoder_layer.1} parent=1 // pred_check_branch
      %28 = sbr.rel (0) target = $region29
    $region28: #{encoder_layer.1} parent=1 // pred_region
      _
    $region29: #{encoder_layer.1} parent=1 // pred_fallthru
      _
    // Predicated region
    $region30: #{encoder_layer.1} parent=1 // pred_check
      _
    $region31: #{encoder_layer.1} parent=1 // pred_check_branch
      %30 = sbr.rel (0) target = $region33
    $region32: #{encoder_layer.1} parent=1 // pred_region
      _
    $region33: #{encoder_layer.1} parent=1 // pred_fallthru
      _
    // Predicated region
    $region34: #{encoder_layer.1} parent=1 // pred_check
      _
    $region35: #{encoder_layer.1} parent=1 // pred_check_branch
      %32 = sbr.rel (0) target = $region37
    $region36: #{encoder_layer.1} parent=1 // pred_region
      _
    $region37: #{encoder_layer.1} parent=1 // pred_fallthru
      _
    %v33 = vld [vmem:[%s0] sm:$0xff]
    %v34 = vld [vmem:[%s0 + $0x8] sm:$0xff]
    %v35 = vld [vmem:[%s7] sm:$0x3f]
    %v36 = vld [vmem:[%s8] sm:$0xff]
    %v37 = vld [vmem:[%s8 + $0x8] sm:$0xff]
    %v38 = vld [vmem:[%s1] sm:$0xff]
    %v39 = vld [vmem:[%s1 + $0x8] sm:$0xff]
    %v40 = vld [vmem:[%s1 + $0x10] sm:$0xff]
    %v41 = vld [vmem:[%s1 + $0x18] sm:$0xff]
    %v42 = vld [vmem:[%s2] sm:$0x1]
    %v44 = vperm.slane %v42, 0
    %vm46 = vcmask 261120
    %v48 = vsel %vm46, %v33, 0
    %v51 = vsel %vm46, %v34, 0
    %53 = vmatpush.msra.mxu0 0.0
    %54 = vmatpush.msra.mxu0 0.0
    %55 = vmatpush.msra.mxu0 0.0
    %56 = vmatpush.msra.mxu0 0.0
    %57 = vmatpush.msra.mxu0 0.0
    %58 = vmatpush.msra.mxu0 0.0
    %59 = vmatpush.msra.mxu0 0.0
    %60 = vmatpush.msra.mxu0 0.0
    %61 = vmatpush.msra.mxu0 0.0
    %62 = vmatpush.msra.mxu0 0.0
    %63 = vmatpush.msra.mxu0 0.0
    %64 = vmatpush.msra.mxu0 0.0
    %65 = vmatpush.msra.mxu0 %v41
    %66 = vmatpush.msra.mxu0 %v40
    %67 = vmatpush.msra.mxu0 %v39
    %68 = vmatpush.msra.mxu0 %v38
    %69 = vmatmul.f32.gmra.mxu0 %v48
    %v70 = vpop.f32.mrf.mxu0
    %v71 = vadd.f32 %v44, %v70
    %72 = vmatmul.f32.gmra.mxu0 %v51
    %v73 = vpop.f32.mrf.mxu0
    %v74 = vadd.f32 %v44, %v73
    %75 = vdwg.mxu0
    %v76 = vld [vmem:[%s3] sm:$0xff]
    %v77 = vld [vmem:[%s3 + $0x8] sm:$0xff]
    %v78 = vld [vmem:[%s3 + $0x10] sm:$0xff]
    %v79 = vld [vmem:[%s3 + $0x18] sm:$0xff]
    %82 = vrot.lane.b32.xlu0 %v71, 96
    %v83 = vpop.permute.xlu0 %82
    %84 = vrot.lane.b32.xlu0 %v74, 96
    %v85 = vpop.permute.xlu0 %84
    %vm86 = vcmask 64512
    %v87 = vsel %vm86, %v71, 0
    %v89 = vsel %vm86, %v74, 0
    %v91 = vsel %vm86, %v83, 0
    %v93 = vsel %vm86, %v85, 0
    %95 = vmatpush.xpose.msra.mxu0 0.0
    %96 = vmatpush.xpose.msra.mxu0 0.0
    %97 = vmatpush.xpose.msra.mxu0 0.0
    %98 = vmatpush.xpose.msra.mxu0 0.0
    %99 = vmatpush.xpose.msra.mxu0 0.0
    %100 = vmatpush.xpose.msra.mxu0 0.0
    %101 = vmatpush.xpose.msra.mxu0 0.0
    %102 = vmatpush.xpose.msra.mxu0 0.0
    %103 = vmatpush.xpose.msra.mxu0 0.0
    %104 = vmatpush.xpose.msra.mxu0 0.0
    %105 = vmatpush.xpose.msra.mxu0 0.0
    %106 = vmatpush.xpose.msra.mxu0 0.0
    %107 = vmatpush.xpose.msra.mxu0 0.0
    %108 = vmatpush.xpose.msra.mxu0 0.0
    %109 = vmatpush.xpose.msra.mxu0 %v93
    %110 = vmatpush.xpose.msra.mxu0 %v91
    %111 = vmatmul.f32.gmra.mxu0 %v87
    %v112 = vpop.f32.mrf.mxu0
    %v113 = vadd.f32 0.0, %v112
    %114 = vmatmul.f32.gmra.mxu0 %v89
    %v115 = vpop.f32.mrf.mxu0
    %v116 = vadd.f32 0.0, %v115
    %117 = vdwg.mxu0
    %v118 = vmul.f32 %v113, 0.35355338
    %v119 = vmul.f32 %v116, 0.35355338
    %v120 = vadd.f32 %v118, %v36
    %v121 = vadd.f32 %v119, %v37
    %vm122 = vcmask 130048
    %v123 = vsel %vm122, %v120, -inf
    %124 = vmax.xlane.f32.xlu0 %v123
    %v125 = vpop.xlane.xlu0 %124
    %v126 = vsel %vm122, %v121, -inf
    %127 = vmax.xlane.f32.xlu0 %v126
    %v128 = vpop.xlane.xlu0 %127
    %v129 = vsub.f32 %v120, %v125
    %v130 = vsub.f32 %v121, %v128
    %v131 = vmul.f32 %v129, 1.442695
    %v132 = vpow.pop %v131
    %v133 = vmul.f32 %v130, 1.442695
    %v134 = vpow.pop %v133
    %v135 = vsel %vm122, %v132, 0.0
    %136 = vadd.xlane.f32.xlu0 %v135
    %v137 = vpop.xlane.xlu0 %136
    %v138 = vsel %vm122, %v134, 0.0
    %139 = vadd.xlane.f32.xlu0 %v138
    %v140 = vpop.xlane.xlu0 %139
    %v141 = vrcp.pop %v137
    %v142 = vmul.f32 %v137, %v141
    %v143 = vsub.f32 1.0, %v142
    %v144 = vmul.f32 %v141, %v143
    %v145 = vadd.f32 %v141, %v144
    %vm146 = vweird.f32 %v137
    %vm147 = vweird.f32 %v141
    %vm148 = vmor %vm146, %vm147
    %v149 = vsel %vm148, %v141, %v145
    %v150 = vand.u32 2147483647, %v137
    %vm151 = vcmp.eq.f32.partialorder %v150, 8.507059e+37
    %v152 = vand.u32 %v137, 2147483648
    %v153 = vor.u32 1.1754944e-38, %v152
    %v154 = vsel %vm151, %v153, %v149
    %v155 = vmul.f32 %v132, %v154
    %v156 = vrcp.pop %v140
    %v157 = vmul.f32 %v140, %v156
    %v158 = vsub.f32 1.0, %v157
    %v159 = vmul.f32 %v156, %v158
    %v160 = vadd.f32 %v156, %v159
    %vm161 = vweird.f32 %v140
    %vm162 = vweird.f32 %v156
    %vm163 = vmor %vm161, %vm162
    %v164 = vsel %vm163, %v156, %v160
    %v165 = vand.u32 2147483647, %v140
    %vm166 = vcmp.eq.f32.partialorder %v165, 8.507059e+37
    %v167 = vand.u32 %v140, 2147483648
    %v168 = vor.u32 1.1754944e-38, %v167
    %v169 = vsel %vm166, %v168, %v164
    %v170 = vmul.f32 %v134, %v169
    %171 = vrot.lane.b32.xlu0 %v71, 64
    %v172 = vpop.permute.xlu0 %171
    %173 = vrot.lane.b32.xlu0 %v74, 64
    %v174 = vpop.permute.xlu0 %173
    %v178 = vsel %vm122, %v155, 0
    %v181 = vsel %vm122, %v170, 0
    %183 = vmatpush.msra.mxu0 0.0
    %184 = vmatpush.msra.mxu0 0.0
    %185 = vmatpush.msra.mxu0 0.0
    %186 = vmatpush.msra.mxu0 0.0
    %187 = vmatpush.msra.mxu0 0.0
    %188 = vmatpush.msra.mxu0 0.0
    %189 = vmatpush.msra.mxu0 0.0
    %190 = vmatpush.msra.mxu0 0.0
    %191 = vmatpush.msra.mxu0 0.0
    %192 = vmatpush.msra.mxu0 0.0
    %193 = vmatpush.msra.mxu0 0.0
    %194 = vmatpush.msra.mxu0 0.0
    %195 = vmatpush.msra.mxu0 0.0
    %196 = vmatpush.msra.mxu0 0.0
    %197 = vmatpush.msra.mxu0 %v174
    %198 = vmatpush.msra.mxu0 %v172
    %199 = vmatmul.f32.gmra.mxu0 %v178
    %v200 = vpop.f32.mrf.mxu0
    %v201 = vadd.f32 0.0, %v200
    %202 = vmatmul.f32.gmra.mxu0 %v181
    %v203 = vpop.f32.mrf.mxu0
    %v204 = vadd.f32 0.0, %v203
    %205 = vdwg.mxu0
    %206 = vrot.lane.b32.xlu0 %v71, 120
    %v207 = vpop.permute.xlu0 %206
    %208 = vrot.lane.b32.xlu0 %v74, 120
    %v209 = vpop.permute.xlu0 %208
    %210 = vrot.lane.b32.xlu0 %v71, 88
    %v211 = vpop.permute.xlu0 %210
    %212 = vrot.lane.b32.xlu0 %v74, 88
    %v213 = vpop.permute.xlu0 %212
    %v214 = vsel %vm86, %v207, 0
    %v216 = vsel %vm86, %v209, 0
    %v218 = vsel %vm86, %v211, 0
    %v220 = vsel %vm86, %v213, 0
    %222 = vmatpush.xpose.msra.mxu0 0.0
    %223 = vmatpush.xpose.msra.mxu0 0.0
    %224 = vmatpush.xpose.msra.mxu0 0.0
    %225 = vmatpush.xpose.msra.mxu0 0.0
    %226 = vmatpush.xpose.msra.mxu0 0.0
    %227 = vmatpush.xpose.msra.mxu0 0.0
    %228 = vmatpush.xpose.msra.mxu0 0.0
    %229 = vmatpush.xpose.msra.mxu0 0.0
    %230 = vmatpush.xpose.msra.mxu0 0.0
    %231 = vmatpush.xpose.msra.mxu0 0.0
    %232 = vmatpush.xpose.msra.mxu0 0.0
    %233 = vmatpush.xpose.msra.mxu0 0.0
    %234 = vmatpush.xpose.msra.mxu0 0.0
    %235 = vmatpush.xpose.msra.mxu0 0.0
    %236 = vmatpush.xpose.msra.mxu0 %v220
    %237 = vmatpush.xpose.msra.mxu0 %v218
    %238 = vmatmul.f32.gmra.mxu0 %v214
    %v239 = vpop.f32.mrf.mxu0
    %v240 = vadd.f32 0.0, %v239
    %241 = vmatmul.f32.gmra.mxu0 %v216
    %v242 = vpop.f32.mrf.mxu0
    %v243 = vadd.f32 0.0, %v242
    %244 = vdwg.mxu0
    %v245 = vmul.f32 %v240, 0.35355338
    %v246 = vmul.f32 %v243, 0.35355338
    %v247 = vadd.f32 %v245, %v36
    %v248 = vadd.f32 %v246, %v37
    %v249 = vsel %vm122, %v247, -inf
    %250 = vmax.xlane.f32.xlu0 %v249
    %v251 = vpop.xlane.xlu0 %250
    %v252 = vsel %vm122, %v248, -inf
    %253 = vmax.xlane.f32.xlu0 %v252
    %v254 = vpop.xlane.xlu0 %253
    %v255 = vsub.f32 %v247, %v251
    %v256 = vsub.f32 %v248, %v254
    %v257 = vmul.f32 %v255, 1.442695
    %v258 = vpow.pop %v257
    %v259 = vmul.f32 %v256, 1.442695
    %v260 = vpow.pop %v259
    %v261 = vsel %vm122, %v258, 0.0
    %262 = vadd.xlane.f32.xlu0 %v261
    %v263 = vpop.xlane.xlu0 %262
    %v264 = vsel %vm122, %v260, 0.0
    %265 = vadd.xlane.f32.xlu0 %v264
    %v266 = vpop.xlane.xlu0 %265
    %v267 = vrcp.pop %v263
    %v268 = vmul.f32 %v263, %v267
    %v269 = vsub.f32 1.0, %v268
    %v270 = vmul.f32 %v267, %v269
    %v271 = vadd.f32 %v267, %v270
    %vm272 = vweird.f32 %v263
    %vm273 = vweird.f32 %v267
    %vm274 = vmor %vm272, %vm273
    %v275 = vsel %vm274, %v267, %v271
    %v276 = vand.u32 2147483647, %v263
    %vm277 = vcmp.eq.f32.partialorder %v276, 8.507059e+37
    %v278 = vand.u32 %v263, 2147483648
    %v279 = vor.u32 1.1754944e-38, %v278
    %v280 = vsel %vm277, %v279, %v275
    %v281 = vmul.f32 %v258, %v280
    %v282 = vrcp.pop %v266
    %v283 = vmul.f32 %v266, %v282
    %v284 = vsub.f32 1.0, %v283
    %v285 = vmul.f32 %v282, %v284
    %v286 = vadd.f32 %v282, %v285
    %vm287 = vweird.f32 %v266
    %vm288 = vweird.f32 %v282
    %vm289 = vmor %vm287, %vm288
    %v290 = vsel %vm289, %v282, %v286
    %v291 = vand.u32 2147483647, %v266
    %vm292 = vcmp.eq.f32.partialorder %v291, 8.507059e+37
    %v293 = vand.u32 %v266, 2147483648
    %v294 = vor.u32 1.1754944e-38, %v293
    %v295 = vsel %vm292, %v294, %v290
    %v296 = vmul.f32 %v260, %v295
    %297 = vrot.lane.b32.xlu0 %v71, 56
    %v298 = vpop.permute.xlu0 %297
    %299 = vrot.lane.b32.xlu0 %v74, 56
    %v300 = vpop.permute.xlu0 %299
    %v304 = vsel %vm122, %v281, 0
    %v307 = vsel %vm122, %v296, 0
    %309 = vmatpush.msra.mxu0 0.0
    %310 = vmatpush.msra.mxu0 0.0
    %311 = vmatpush.msra.mxu0 0.0
    %312 = vmatpush.msra.mxu0 0.0
    %313 = vmatpush.msra.mxu0 0.0
    %314 = vmatpush.msra.mxu0 0.0
    %315 = vmatpush.msra.mxu0 0.0
    %316 = vmatpush.msra.mxu0 0.0
    %317 = vmatpush.msra.mxu0 0.0
    %318 = vmatpush.msra.mxu0 0.0
    %319 = vmatpush.msra.mxu0 0.0
    %320 = vmatpush.msra.mxu0 0.0
    %321 = vmatpush.msra.mxu0 0.0
    %322 = vmatpush.msra.mxu0 0.0
    %323 = vmatpush.msra.mxu0 %v300
    %324 = vmatpush.msra.mxu0 %v298
    %325 = vmatmul.f32.gmra.mxu0 %v304
    %v326 = vpop.f32.mrf.mxu0
    %v327 = vadd.f32 0.0, %v326
    %328 = vmatmul.f32.gmra.mxu0 %v307
    %v329 = vpop.f32.mrf.mxu0
    %v330 = vadd.f32 0.0, %v329
    %331 = vdwg.mxu0
    %v333 = vsel %vm86, %v327, 0
    %v336 = vsel %vm86, %v330, 0
    %338 = vmatpush.msra.mxu0 0.0
    %339 = vmatpush.msra.mxu0 0.0
    %340 = vmatpush.msra.mxu0 0.0
    %341 = vmatpush.msra.mxu0 0.0
    %342 = vmatpush.msra.mxu0 0.0
    %343 = vmatpush.msra.mxu0 0.0
    %344 = vmatpush.msra.mxu0 0.0
    %345 = vmatpush.msra.mxu0 0.0
    %346 = vmatpush.msra.mxu0 0.0
    %347 = vmatpush.msra.mxu0 0.0
    %348 = vmatpush.msra.mxu0 0.0
    %349 = vmatpush.msra.mxu0 0.0
    %350 = vmatpush.msra.mxu0 0.0
    %351 = vmatpush.msra.mxu0 0.0
    %352 = vmatpush.msra.mxu0 0.0
    %353 = vmatpush.msra.mxu0 %v77
    %354 = vmatmul.f32.gmra.mxu0 %v333
    %v355 = vpop.f32.mrf.mxu0
    %v356 = vadd.f32 0.0, %v355
    %357 = vmatmul.f32.gmra.mxu0 %v336
    %v358 = vpop.f32.mrf.mxu0
    %v359 = vadd.f32 0.0, %v358
    %360 = vdwg.mxu0
    %v362 = vsel %vm86, %v201, 0
    %v365 = vsel %vm86, %v204, 0
    %367 = vmatpush.msra.mxu0 0.0
    %368 = vmatpush.msra.mxu0 0.0
    %369 = vmatpush.msra.mxu0 0.0
    %370 = vmatpush.msra.mxu0 0.0
    %371 = vmatpush.msra.mxu0 0.0
    %372 = vmatpush.msra.mxu0 0.0
    %373 = vmatpush.msra.mxu0 0.0
    %374 = vmatpush.msra.mxu0 0.0
    %375 = vmatpush.msra.mxu0 0.0
    %376 = vmatpush.msra.mxu0 0.0
    %377 = vmatpush.msra.mxu0 0.0
    %378 = vmatpush.msra.mxu0 0.0
    %379 = vmatpush.msra.mxu0 0.0
    %380 = vmatpush.msra.mxu0 0.0
    %381 = vmatpush.msra.mxu0 0.0
    %382 = vmatpush.msra.mxu0 %v76
    %383 = vmatmul.f32.gmra.mxu0 %v362
    %v384 = vpop.f32.mrf.mxu0
    %v385 = vadd.f32 %v356, %v384
    %386 = vmatmul.f32.gmra.mxu0 %v365
    %v387 = vpop.f32.mrf.mxu0
    %v388 = vadd.f32 %v359, %v387
    %389 = vdwg.mxu0
    %390 = vrot.lane.b32.xlu0 %v71, 112
    %v391 = vpop.permute.xlu0 %390
    %392 = vrot.lane.b32.xlu0 %v74, 112
    %v393 = vpop.permute.xlu0 %392
    %394 = vrot.lane.b32.xlu0 %v71, 80
    %v395 = vpop.permute.xlu0 %394
    %396 = vrot.lane.b32.xlu0 %v74, 80
    %v397 = vpop.permute.xlu0 %396
    %v398 = vsel %vm86, %v391, 0
    %v400 = vsel %vm86, %v393, 0
    %v402 = vsel %vm86, %v395, 0
    %v404 = vsel %vm86, %v397, 0
    %406 = vmatpush.xpose.msra.mxu0 0.0
    %407 = vmatpush.xpose.msra.mxu0 0.0
    %408 = vmatpush.xpose.msra.mxu0 0.0
    %409 = vmatpush.xpose.msra.mxu0 0.0
    %410 = vmatpush.xpose.msra.mxu0 0.0
    %411 = vmatpush.xpose.msra.mxu0 0.0
    %412 = vmatpush.xpose.msra.mxu0 0.0
    %413 = vmatpush.xpose.msra.mxu0 0.0
    %414 = vmatpush.xpose.msra.mxu0 0.0
    %415 = vmatpush.xpose.msra.mxu0 0.0
    %416 = vmatpush.xpose.msra.mxu0 0.0
    %417 = vmatpush.xpose.msra.mxu0 0.0
    %418 = vmatpush.xpose.msra.mxu0 0.0
    %419 = vmatpush.xpose.msra.mxu0 0.0
    %420 = vmatpush.xpose.msra.mxu0 %v404
    %421 = vmatpush.xpose.msra.mxu0 %v402
    %422 = vmatmul.f32.gmra.mxu0 %v398
    %v423 = vpop.f32.mrf.mxu0
    %v424 = vadd.f32 0.0, %v423
    %425 = vmatmul.f32.gmra.mxu0 %v400
    %v426 = vpop.f32.mrf.mxu0
    %v427 = vadd.f32 0.0, %v426
    %428 = vdwg.mxu0
    %v429 = vmul.f32 %v424, 0.35355338
    %v430 = vmul.f32 %v427, 0.35355338
    %v431 = vadd.f32 %v429, %v36
    %v432 = vadd.f32 %v430, %v37
    %v433 = vsel %vm122, %v431, -inf
    %434 = vmax.xlane.f32.xlu0 %v433
    %v435 = vpop.xlane.xlu0 %434
    %v436 = vsel %vm122, %v432, -inf
    %437 = vmax.xlane.f32.xlu0 %v436
    %v438 = vpop.xlane.xlu0 %437
    %v439 = vsub.f32 %v431, %v435
    %v440 = vsub.f32 %v432, %v438
    %v441 = vmul.f32 %v439, 1.442695
    %v442 = vpow.pop %v441
    %v443 = vmul.f32 %v440, 1.442695
    %v444 = vpow.pop %v443
    %v445 = vsel %vm122, %v442, 0.0
    %446 = vadd.xlane.f32.xlu0 %v445
    %v447 = vpop.xlane.xlu0 %446
    %v448 = vsel %vm122, %v444, 0.0
    %449 = vadd.xlane.f32.xlu0 %v448
    %v450 = vpop.xlane.xlu0 %449
    %v451 = vrcp.pop %v447
    %v452 = vmul.f32 %v447, %v451
    %v453 = vsub.f32 1.0, %v452
    %v454 = vmul.f32 %v451, %v453
    %v455 = vadd.f32 %v451, %v454
    %vm456 = vweird.f32 %v447
    %vm457 = vweird.f32 %v451
    %vm458 = vmor %vm456, %vm457
    %v459 = vsel %vm458, %v451, %v455
    %v460 = vand.u32 2147483647, %v447
    %vm461 = vcmp.eq.f32.partialorder %v460, 8.507059e+37
    %v462 = vand.u32 %v447, 2147483648
    %v463 = vor.u32 1.1754944e-38, %v462
    %v464 = vsel %vm461, %v463, %v459
    %v465 = vmul.f32 %v442, %v464
    %v466 = vrcp.pop %v450
    %v467 = vmul.f32 %v450, %v466
    %v468 = vsub.f32 1.0, %v467
    %v469 = vmul.f32 %v466, %v468
    %v470 = vadd.f32 %v466, %v469
    %vm471 = vweird.f32 %v450
    %vm472 = vweird.f32 %v466
    %vm473 = vmor %vm471, %vm472
    %v474 = vsel %vm473, %v466, %v470
    %v475 = vand.u32 2147483647, %v450
    %vm476 = vcmp.eq.f32.partialorder %v475, 8.507059e+37
    %v477 = vand.u32 %v450, 2147483648
    %v478 = vor.u32 1.1754944e-38, %v477
    %v479 = vsel %vm476, %v478, %v474
    %v480 = vmul.f32 %v444, %v479
    %481 = vrot.lane.b32.xlu0 %v71, 48
    %v482 = vpop.permute.xlu0 %481
    %483 = vrot.lane.b32.xlu0 %v74, 48
    %v484 = vpop.permute.xlu0 %483
    %v488 = vsel %vm122, %v465, 0
    %v491 = vsel %vm122, %v480, 0
    %493 = vmatpush.msra.mxu0 0.0
    %494 = vmatpush.msra.mxu0 0.0
    %495 = vmatpush.msra.mxu0 0.0
    %496 = vmatpush.msra.mxu0 0.0
    %497 = vmatpush.msra.mxu0 0.0
    %498 = vmatpush.msra.mxu0 0.0
    %499 = vmatpush.msra.mxu0 0.0
    %500 = vmatpush.msra.mxu0 0.0
    %501 = vmatpush.msra.mxu0 0.0
    %502 = vmatpush.msra.mxu0 0.0
    %503 = vmatpush.msra.mxu0 0.0
    %504 = vmatpush.msra.mxu0 0.0
    %505 = vmatpush.msra.mxu0 0.0
    %506 = vmatpush.msra.mxu0 0.0
    %507 = vmatpush.msra.mxu0 %v484
    %508 = vmatpush.msra.mxu0 %v482
    %509 = vmatmul.f32.gmra.mxu0 %v488
    %v510 = vpop.f32.mrf.mxu0
    %v511 = vadd.f32 0.0, %v510
    %512 = vmatmul.f32.gmra.mxu0 %v491
    %v513 = vpop.f32.mrf.mxu0
    %v514 = vadd.f32 0.0, %v513
    %515 = vdwg.mxu0
    %v517 = vsel %vm86, %v511, 0
    %v520 = vsel %vm86, %v514, 0
    %522 = vmatpush.msra.mxu0 0.0
    %523 = vmatpush.msra.mxu0 0.0
    %524 = vmatpush.msra.mxu0 0.0
    %525 = vmatpush.msra.mxu0 0.0
    %526 = vmatpush.msra.mxu0 0.0
    %527 = vmatpush.msra.mxu0 0.0
    %528 = vmatpush.msra.mxu0 0.0
    %529 = vmatpush.msra.mxu0 0.0
    %530 = vmatpush.msra.mxu0 0.0
    %531 = vmatpush.msra.mxu0 0.0
    %532 = vmatpush.msra.mxu0 0.0
    %533 = vmatpush.msra.mxu0 0.0
    %534 = vmatpush.msra.mxu0 0.0
    %535 = vmatpush.msra.mxu0 0.0
    %536 = vmatpush.msra.mxu0 0.0
    %537 = vmatpush.msra.mxu0 %v78
    %538 = vmatmul.f32.gmra.mxu0 %v517
    %v539 = vpop.f32.mrf.mxu0
    %v540 = vadd.f32 0.0, %v539
    %541 = vmatmul.f32.gmra.mxu0 %v520
    %v542 = vpop.f32.mrf.mxu0
    %v543 = vadd.f32 0.0, %v542
    %544 = vdwg.mxu0
    %v545 = vadd.f32 %v385, %v540
    %v546 = vadd.f32 %v388, %v543
    %547 = vrot.lane.b32.xlu0 %v71, 104
    %v548 = vpop.permute.xlu0 %547
    %549 = vrot.lane.b32.xlu0 %v74, 104
    %v550 = vpop.permute.xlu0 %549
    %551 = vrot.lane.b32.xlu0 %v71, 72
    %v552 = vpop.permute.xlu0 %551
    %553 = vrot.lane.b32.xlu0 %v74, 72
    %v554 = vpop.permute.xlu0 %553
    %v555 = vsel %vm86, %v548, 0
    %v557 = vsel %vm86, %v550, 0
    %v559 = vsel %vm86, %v552, 0
    %v561 = vsel %vm86, %v554, 0
    %563 = vmatpush.xpose.msra.mxu0 0.0
    %564 = vmatpush.xpose.msra.mxu0 0.0
    %565 = vmatpush.xpose.msra.mxu0 0.0
    %566 = vmatpush.xpose.msra.mxu0 0.0
    %567 = vmatpush.xpose.msra.mxu0 0.0
    %568 = vmatpush.xpose.msra.mxu0 0.0
    %569 = vmatpush.xpose.msra.mxu0 0.0
    %570 = vmatpush.xpose.msra.mxu0 0.0
    %571 = vmatpush.xpose.msra.mxu0 0.0
    %572 = vmatpush.xpose.msra.mxu0 0.0
    %573 = vmatpush.xpose.msra.mxu0 0.0
    %574 = vmatpush.xpose.msra.mxu0 0.0
    %575 = vmatpush.xpose.msra.mxu0 0.0
    %576 = vmatpush.xpose.msra.mxu0 0.0
    %577 = vmatpush.xpose.msra.mxu0 %v561
    %578 = vmatpush.xpose.msra.mxu0 %v559
    %579 = vmatmul.f32.gmra.mxu0 %v555
    %v580 = vpop.f32.mrf.mxu0
    %v581 = vadd.f32 0.0, %v580
    %582 = vmatmul.f32.gmra.mxu0 %v557
    %v583 = vpop.f32.mrf.mxu0
    %v584 = vadd.f32 0.0, %v583
    %585 = vdwg.mxu0
    %v586 = vmul.f32 %v581, 0.35355338
    %v587 = vmul.f32 %v584, 0.35355338
    %v588 = vadd.f32 %v586, %v36
    %v589 = vadd.f32 %v587, %v37
    %v590 = vsel %vm122, %v588, -inf
    %591 = vmax.xlane.f32.xlu0 %v590
    %v592 = vpop.xlane.xlu0 %591
    %v593 = vsel %vm122, %v589, -inf
    %594 = vmax.xlane.f32.xlu0 %v593
    %v595 = vpop.xlane.xlu0 %594
    %v596 = vsub.f32 %v588, %v592
    %v597 = vsub.f32 %v589, %v595
    %v598 = vmul.f32 %v596, 1.442695
    %v599 = vpow.pop %v598
    %v600 = vmul.f32 %v597, 1.442695
    %v601 = vpow.pop %v600
    %v602 = vsel %vm122, %v599, 0.0
    %603 = vadd.xlane.f32.xlu0 %v602
    %v604 = vpop.xlane.xlu0 %603
    %v605 = vsel %vm122, %v601, 0.0
    %606 = vadd.xlane.f32.xlu0 %v605
    %v607 = vpop.xlane.xlu0 %606
    %v608 = vrcp.pop %v604
    %v609 = vmul.f32 %v604, %v608
    %v610 = vsub.f32 1.0, %v609
    %v611 = vmul.f32 %v608, %v610
    %v612 = vadd.f32 %v608, %v611
    %vm613 = vweird.f32 %v604
    %vm614 = vweird.f32 %v608
    %vm615 = vmor %vm613, %vm614
    %v616 = vsel %vm615, %v608, %v612
    %v617 = vand.u32 2147483647, %v604
    %vm618 = vcmp.eq.f32.partialorder %v617, 8.507059e+37
    %v619 = vand.u32 %v604, 2147483648
    %v620 = vor.u32 1.1754944e-38, %v619
    %v621 = vsel %vm618, %v620, %v616
    %v622 = vmul.f32 %v599, %v621
    %v623 = vrcp.pop %v607
    %v624 = vmul.f32 %v607, %v623
    %v625 = vsub.f32 1.0, %v624
    %v626 = vmul.f32 %v623, %v625
    %v627 = vadd.f32 %v623, %v626
    %vm628 = vweird.f32 %v607
    %vm629 = vweird.f32 %v623
    %vm630 = vmor %vm628, %vm629
    %v631 = vsel %vm630, %v623, %v627
    %v632 = vand.u32 2147483647, %v607
    %vm633 = vcmp.eq.f32.partialorder %v632, 8.507059e+37
    %v634 = vand.u32 %v607, 2147483648
    %v635 = vor.u32 1.1754944e-38, %v634
    %v636 = vsel %vm633, %v635, %v631
    %v637 = vmul.f32 %v601, %v636
    %638 = vrot.lane.b32.xlu0 %v71, 40
    %v639 = vpop.permute.xlu0 %638
    %640 = vrot.lane.b32.xlu0 %v74, 40
    %v641 = vpop.permute.xlu0 %640
    %v645 = vsel %vm122, %v622, 0
    %v648 = vsel %vm122, %v637, 0
    %650 = vmatpush.msra.mxu0 0.0
    %651 = vmatpush.msra.mxu0 0.0
    %652 = vmatpush.msra.mxu0 0.0
    %653 = vmatpush.msra.mxu0 0.0
    %654 = vmatpush.msra.mxu0 0.0
    %655 = vmatpush.msra.mxu0 0.0
    %656 = vmatpush.msra.mxu0 0.0
    %657 = vmatpush.msra.mxu0 0.0
    %658 = vmatpush.msra.mxu0 0.0
    %659 = vmatpush.msra.mxu0 0.0
    %660 = vmatpush.msra.mxu0 0.0
    %661 = vmatpush.msra.mxu0 0.0
    %662 = vmatpush.msra.mxu0 0.0
    %663 = vmatpush.msra.mxu0 0.0
    %664 = vmatpush.msra.mxu0 %v641
    %665 = vmatpush.msra.mxu0 %v639
    %666 = vmatmul.f32.gmra.mxu0 %v645
    %v667 = vpop.f32.mrf.mxu0
    %v668 = vadd.f32 0.0, %v667
    %669 = vmatmul.f32.gmra.mxu0 %v648
    %v670 = vpop.f32.mrf.mxu0
    %v671 = vadd.f32 0.0, %v670
    %672 = vdwg.mxu0
    %v674 = vsel %vm86, %v668, 0
    %v677 = vsel %vm86, %v671, 0
    %679 = vmatpush.msra.mxu0 0.0
    %680 = vmatpush.msra.mxu0 0.0
    %681 = vmatpush.msra.mxu0 0.0
    %682 = vmatpush.msra.mxu0 0.0
    %683 = vmatpush.msra.mxu0 0.0
    %684 = vmatpush.msra.mxu0 0.0
    %685 = vmatpush.msra.mxu0 0.0
    %686 = vmatpush.msra.mxu0 0.0
    %687 = vmatpush.msra.mxu0 0.0
    %688 = vmatpush.msra.mxu0 0.0
    %689 = vmatpush.msra.mxu0 0.0
    %690 = vmatpush.msra.mxu0 0.0
    %691 = vmatpush.msra.mxu0 0.0
    %692 = vmatpush.msra.mxu0 0.0
    %693 = vmatpush.msra.mxu0 0.0
    %694 = vmatpush.msra.mxu0 %v79
    %695 = vmatmul.f32.gmra.mxu0 %v674
    %v696 = vpop.f32.mrf.mxu0
    %v697 = vadd.f32 0.0, %v696
    %698 = vmatmul.f32.gmra.mxu0 %v677
    %v699 = vpop.f32.mrf.mxu0
    %v700 = vadd.f32 0.0, %v699
    %701 = vdwg.mxu0
    %v702 = vadd.f32 %v545, %v697
    %v703 = vadd.f32 %v546, %v700
    %v704 = vperm.slane %v35, 0
    %v705 = vadd.f32 %v702, %v704
    %v706 = vadd.f32 %v703, %v704
    %v707 = vadd.f32 %v705, %v33
    %v708 = vadd.f32 %v706, %v34
    %v709 = vsel %vm46, %v707, 0.0
    %710 = vadd.xlane.f32.xlu0 %v709
    %v711 = vpop.xlane.xlu0 %710
    %v712 = vsel %vm46, %v708, 0.0
    %713 = vadd.xlane.f32.xlu0 %v712
    %v714 = vpop.xlane.xlu0 %713
    %v715 = vrcp.pop 32.0
    %v716 = vmul.f32 32.0, %v715
    %v717 = vsub.f32 1.0, %v716
    %v718 = vmul.f32 %v715, %v717
    %v719 = vadd.f32 %v715, %v718
    %vm720 = vweird.f32 %v715
    %v721 = vsel %vm720, %v715, %v719
    %v722 = vmul.f32 %v711, %v721
    %v723 = vmul.f32 %v714, %v721
    %v724 = vsub.f32 %v707, %v722
    %v725 = vsub.f32 %v708, %v723
    %v726 = vmul.f32 %v724, %v724
    %v727 = vmul.f32 %v725, %v725
    %v728 = vsel %vm46, %v726, 0.0
    %729 = vadd.xlane.f32.xlu0 %v728
    %v730 = vpop.xlane.xlu0 %729
    %v731 = vsel %vm46, %v727, 0.0
    %732 = vadd.xlane.f32.xlu0 %v731
    %v733 = vpop.xlane.xlu0 %732
    %v734 = vrcp.pop 31.0
    %v735 = vmul.f32 31.0, %v734
    %v736 = vsub.f32 1.0, %v735
    %v737 = vmul.f32 %v734, %v736
    %v738 = vadd.f32 %v734, %v737
    %vm739 = vweird.f32 %v734
    %v740 = vsel %vm739, %v734, %v738
    %v741 = vmul.f32 %v730, %v740
    %v742 = vmul.f32 %v733, %v740
    %v743 = vrsqrt.pop %v741
    %v744 = vmul.f32 %v743, %v741
    %v745 = vmul.f32 %v744, %v743
    %v746 = vmul.f32 0.5, %v745
    %v747 = vsub.f32 1.5, %v746
    %v748 = vmul.f32 %v743, %v747
    %v749 = vmul.f32 %v741, %v748
    %vm750 = vcmp.eq.f32.partialorder %v741, inf
    %v751 = vsel %vm750, %v741, %v749
    %vm752 = vcmp.eq.f32.partialorder %v741, 0.0
    %v753 = vand.u32 %v741, 2147483648
    %v754 = vsel %vm752, %v753, %v751
    %v755 = vrsqrt.pop %v742
    %v756 = vmul.f32 %v755, %v742
    %v757 = vmul.f32 %v756, %v755
    %v758 = vmul.f32 0.5, %v757
    %v759 = vsub.f32 1.5, %v758
    %v760 = vmul.f32 %v755, %v759
    %v761 = vmul.f32 %v742, %v760
    %vm762 = vcmp.eq.f32.partialorder %v742, inf
    %v763 = vsel %vm762, %v742, %v761
    %vm764 = vcmp.eq.f32.partialorder %v742, 0.0
    %v765 = vand.u32 %v742, 2147483648
    %v766 = vsel %vm764, %v765, %v763
    %v767 = vperm.slane %v35, 1
    %v768 = vmul.f32 %v767, %v724
    %v769 = vmul.f32 %v767, %v725
    %v770 = vadd.f32 %v754, 1e-06
    %v771 = vadd.f32 %v766, 1e-06
    %v772 = vrcp.pop %v770
    %v773 = vmul.f32 %v770, %v772
    %v774 = vsub.f32 1.0, %v773
    %v775 = vmul.f32 %v772, %v774
    %v776 = vadd.f32 %v772, %v775
    %vm777 = vweird.f32 %v770
    %vm778 = vweird.f32 %v772
    %vm779 = vmor %vm777, %vm778
    %v780 = vsel %vm779, %v772, %v776
    %v781 = vand.u32 2147483647, %v770
    %vm782 = vcmp.eq.f32.partialorder %v781, 8.507059e+37
    %v783 = vand.u32 %v770, 2147483648
    %v784 = vor.u32 1.1754944e-38, %v783
    %v785 = vsel %vm782, %v784, %v780
    %v786 = vmul.f32 %v768, %v785
    %v787 = vrcp.pop %v771
    %v788 = vmul.f32 %v771, %v787
    %v789 = vsub.f32 1.0, %v788
    %v790 = vmul.f32 %v787, %v789
    %v791 = vadd.f32 %v787, %v790
    %vm792 = vweird.f32 %v771
    %vm793 = vweird.f32 %v787
    %vm794 = vmor %vm792, %vm793
    %v795 = vsel %vm794, %v787, %v791
    %v796 = vand.u32 2147483647, %v771
    %vm797 = vcmp.eq.f32.partialorder %v796, 8.507059e+37
    %v798 = vand.u32 %v771, 2147483648
    %v799 = vor.u32 1.1754944e-38, %v798
    %v800 = vsel %vm797, %v799, %v795
    %v801 = vmul.f32 %v769, %v800
    %v802 = vperm.slane %v35, 2
    %v803 = vadd.f32 %v786, %v802
    %v804 = vadd.f32 %v801, %v802
    %v805 = vld [vmem:[%s4] sm:$0xff]
    %v806 = vld [vmem:[%s4 + $0x8] sm:$0xff]
    %v807 = vld [vmem:[%s4 + $0x10] sm:$0xff]
    %v808 = vld [vmem:[%s4 + $0x18] sm:$0xff]
    %v809 = vld [vmem:[%s5] sm:$0x1]
    %v811 = vperm.slane %v809, 0
    %v814 = vsel %vm46, %v803, 0
    %v817 = vsel %vm46, %v804, 0
    %819 = vmatpush.msra.mxu0 0.0
    %820 = vmatpush.msra.mxu0 0.0
    %821 = vmatpush.msra.mxu0 0.0
    %822 = vmatpush.msra.mxu0 0.0
    %823 = vmatpush.msra.mxu0 0.0
    %824 = vmatpush.msra.mxu0 0.0
    %825 = vmatpush.msra.mxu0 0.0
    %826 = vmatpush.msra.mxu0 0.0
    %827 = vmatpush.msra.mxu0 0.0
    %828 = vmatpush.msra.mxu0 0.0
    %829 = vmatpush.msra.mxu0 0.0
    %830 = vmatpush.msra.mxu0 0.0
    %831 = vmatpush.msra.mxu0 %v808
    %832 = vmatpush.msra.mxu0 %v807
    %833 = vmatpush.msra.mxu0 %v806
    %834 = vmatpush.msra.mxu0 %v805
    %835 = vmatmul.f32.gmra.mxu0 %v814
    %v836 = vpop.f32.mrf.mxu0
    %v837 = vadd.f32 %v811, %v836
    %838 = vmatmul.f32.gmra.mxu0 %v817
    %v839 = vpop.f32.mrf.mxu0
    %v840 = vadd.f32 %v811, %v839
    %841 = vdwg.mxu0
    %v842 = vmax.f32 %v837, 0.0
    %v843 = vmax.f32 %v840, 0.0
    %v844 = vld [vmem:[%s6] sm:$0xff]
    %v845 = vld [vmem:[%s6 + $0x8] sm:$0xff]
    %v846 = vld [vmem:[%s6 + $0x10] sm:$0xff]
    %v847 = vld [vmem:[%s6 + $0x18] sm:$0xff]
    %v848 = vld [vmem:[%s6 + $0x20] sm:$0xff]
    %v849 = vld [vmem:[%s6 + $0x28] sm:$0xff]
    %v850 = vld [vmem:[%s6 + $0x30] sm:$0xff]
    %v851 = vld [vmem:[%s6 + $0x38] sm:$0xff]
    %v852 = vperm.slane %v35, 3
    %vm853 = vcmask 523264
    %v855 = vsel %vm853, %v842, 0
    %v858 = vsel %vm853, %v843, 0
    %860 = vmatpush.msra.mxu0 0.0
    %861 = vmatpush.msra.mxu0 0.0
    %862 = vmatpush.msra.mxu0 0.0
    %863 = vmatpush.msra.mxu0 0.0
    %864 = vmatpush.msra.mxu0 0.0
    %865 = vmatpush.msra.mxu0 0.0
    %866 = vmatpush.msra.mxu0 0.0
    %867 = vmatpush.msra.mxu0 0.0
    %868 = vmatpush.msra.mxu0 %v851
    %869 = vmatpush.msra.mxu0 %v850
    %870 = vmatpush.msra.mxu0 %v849
    %871 = vmatpush.msra.mxu0 %v848
    %872 = vmatpush.msra.mxu0 %v847
    %873 = vmatpush.msra.mxu0 %v846
    %874 = vmatpush.msra.mxu0 %v845
    %875 = vmatpush.msra.mxu0 %v844
    %876 = vmatmul.f32.gmra.mxu0 %v855
    %v877 = vpop.f32.mrf.mxu0
    %v878 = vadd.f32 %v852, %v877
    %879 = vmatmul.f32.gmra.mxu0 %v858
    %v880 = vpop.f32.mrf.mxu0
    %v881 = vadd.f32 %v852, %v880
    %882 = vdwg.mxu0
    %v883 = vadd.f32 %v878, %v803
    %v884 = vadd.f32 %v881, %v804
    %v885 = vsel %vm46, %v883, 0.0
    %886 = vadd.xlane.f32.xlu0 %v885
    %v887 = vpop.xlane.xlu0 %886
    %v888 = vsel %vm46, %v884, 0.0
    %889 = vadd.xlane.f32.xlu0 %v888
    %v890 = vpop.xlane.xlu0 %889
    %v891 = vmul.f32 %v887, %v721
    %v892 = vmul.f32 %v890, %v721
    %v893 = vsub.f32 %v883, %v891
    %v894 = vsub.f32 %v884, %v892
    %v895 = vmul.f32 %v893, %v893
    %v896 = vmul.f32 %v894, %v894
    %v897 = vsel %vm46, %v895, 0.0
    %898 = vadd.xlane.f32.xlu0 %v897
    %v899 = vpop.xlane.xlu0 %898
    %v900 = vsel %vm46, %v896, 0.0
    %901 = vadd.xlane.f32.xlu0 %v900
    %v902 = vpop.xlane.xlu0 %901
    %v903 = vmul.f32 %v899, %v740
    %v904 = vmul.f32 %v902, %v740
    %v905 = vrsqrt.pop %v903
    %v906 = vmul.f32 %v905, %v903
    %v907 = vmul.f32 %v906, %v905
    %v908 = vmul.f32 0.5, %v907
    %v909 = vsub.f32 1.5, %v908
    %v910 = vmul.f32 %v905, %v909
    %v911 = vmul.f32 %v903, %v910
    %vm912 = vcmp.eq.f32.partialorder %v903, inf
    %v913 = vsel %vm912, %v903, %v911
    %vm914 = vcmp.eq.f32.partialorder %v903, 0.0
    %v915 = vand.u32 %v903, 2147483648
    %v916 = vsel %vm914, %v915, %v913
    %v917 = vrsqrt.pop %v904
    %v918 = vmul.f32 %v917, %v904
    %v919 = vmul.f32 %v918, %v917
    %v920 = vmul.f32 0.5, %v919
    %v921 = vsub.f32 1.5, %v920
    %v922 = vmul.f32 %v917, %v921
    %v923 = vmul.f32 %v904, %v922
    %vm924 = vcmp.eq.f32.partialorder %v904, inf
    %v925 = vsel %vm924, %v904, %v923
    %vm926 = vcmp.eq.f32.partialorder %v904, 0.0
    %v927 = vand.u32 %v904, 2147483648
    %v928 = vsel %vm926, %v927, %v925
    %v929 = vperm.slane %v35, 4
    %v930 = vmul.f32 %v929, %v893
    %v931 = vmul.f32 %v929, %v894
    %v932 = vadd.f32 %v916, 1e-06
    %v933 = vadd.f32 %v928, 1e-06
    %v934 = vrcp.pop %v932
    %v935 = vmul.f32 %v932, %v934
    %v936 = vsub.f32 1.0, %v935
    %v937 = vmul.f32 %v934, %v936
    %v938 = vadd.f32 %v934, %v937
    %vm939 = vweird.f32 %v932
    %vm940 = vweird.f32 %v934
    %vm941 = vmor %vm939, %vm940
    %v942 = vsel %vm941, %v934, %v938
    %v943 = vand.u32 2147483647, %v932
    %vm944 = vcmp.eq.f32.partialorder %v943, 8.507059e+37
    %v945 = vand.u32 %v932, 2147483648
    %v946 = vor.u32 1.1754944e-38, %v945
    %v947 = vsel %vm944, %v946, %v942
    %v948 = vmul.f32 %v930, %v947
    %v949 = vrcp.pop %v933
    %v950 = vmul.f32 %v933, %v949
    %v951 = vsub.f32 1.0, %v950
    %v952 = vmul.f32 %v949, %v951
    %v953 = vadd.f32 %v949, %v952
    %vm954 = vweird.f32 %v933
    %vm955 = vweird.f32 %v949
    %vm956 = vmor %vm954, %vm955
    %v957 = vsel %vm956, %v949, %v953
    %v958 = vand.u32 2147483647, %v933
    %vm959 = vcmp.eq.f32.partialorder %v958, 8.507059e+37
    %v960 = vand.u32 %v933, 2147483648
    %v961 = vor.u32 1.1754944e-38, %v960
    %v962 = vsel %vm959, %v961, %v957
    %v963 = vmul.f32 %v931, %v962
    %v964 = vperm.slane %v35, 5
    %v965 = vadd.f32 %v948, %v964
    %v966 = vadd.f32 %v963, %v964
    %967 = vst.msk [vmem:[#allocation2] sm:$0xff] %vm46, %v965
    %968 = vst.msk [vmem:[#allocation2 + $0x8] sm:$0xff] %vm46, %v966
    // Predicated region
    $region38: #{encoder_layer.1} parent=1 // pred_check
      _
    $region39: #{encoder_layer.1} parent=1 // pred_check_branch
      %970 = sbr.rel (0) target = $region41
    $region40: #{encoder_layer.1} parent=1 // pred_region
      %972 = vsyncadd [#allocation3], 0
      %s973 = sshll.u32 [#allocation2], 4
      %s974 = int_to_ptr.vmem [resolvable:$true] %s973
      %s975 = sshll.u32 %s9, 4
      %s976 = int_to_ptr.hbm [resolvable:$true] %s975
      %981 = dma.vmem_to_hbm [thread:$0]  %s974, 256, %s976, [#allocation3], 128, 128, 8
    $region41: #{encoder_layer.1} parent=1 // pred_fallthru
      _
    // Predicated region
    $region42: #{encoder_layer.1} parent=1 // pred_check
      _
    $region43: #{encoder_layer.1} parent=1 // pred_check_branch
      %983 = sbr.rel (0) target = $region45
    $region44: #{encoder_layer.1} parent=1 // pred_region
      %985 = dma.done [#allocation3], 256
    $region45: #{encoder_layer.1} parent=1 // pred_fallthru
      _
    %986 = vsyncpa [#allocation3], 1

</llo_original>
